<compile_context>
chip_gen: v7x
topology: tpu7x:2x2x1
jax: 0.10.0
libtpu: 0.0.40
codegen_flags: <defaults>
</compile_context>

<pallas_src>
import functools

import jax
import jax.numpy as jnp
from jax.experimental import pallas as pl
from jax.experimental.pallas import tpu as pltpu


def attention_kernel(h_ref, enc_ref, wh_ref, we_ref, b_ref, v_ref, out_ref,
                     hb_sc, m_sc, l_sc, acc_sc, *, block_s):
    """One (batch-tile, seq-tile) step of the online-softmax attention.

    Refs:
      h_ref:   (tb, H)      hidden states (middle 1-dim squeezed in wrapper)
      enc_ref: (tb, ts, H)  encoder-output tile
      wh_ref:  (H, H)       W[:, :H].T  (hidden half of the concat)
      we_ref:  (H, H)       W[:, H:].T  (encoder half of the concat)
      b_ref:   (1, H)       Linear bias row
      v_ref:   (1, H)       scoring vector (lane-dense row)
      out_ref: (tb, H)      context (lane-dense 2-D store, resident across S tiles)
    Scratch:
      hb_sc:   (tb, H) f32  hidden @ Wh + b   (computed once per batch tile)
      m_sc:    (tb, 1) f32  running max
      l_sc:    (tb, 1) f32  running softmax denominator
      acc_sc:  (tb, H) f32  running weighted-context accumulator
    """
    si = pl.program_id(1)
    last_si = pl.num_programs(1) - 1

    @pl.when(si == 0)
    def _init():
        # S-invariant hidden projection with bias folded in (one MXU op per batch tile).
        hb_sc[...] = (jnp.dot(h_ref[...], wh_ref[...],
                              preferred_element_type=jnp.float32)
                      + b_ref[...])
        m_sc[...] = jnp.full_like(m_sc, -jnp.inf)
        l_sc[...] = jnp.zeros_like(l_sc)
        acc_sc[...] = jnp.zeros_like(acc_sc)

    tb, ts, H = enc_ref.shape
    enc = enc_ref[...]                                              # (tb, ts, H)

    # Encoder projection for this tile: fused (tb*ts, H) @ (H, H) MXU op.
    # (wrapper guarantees ts % 8 == 0 or ts == S, so the collapse is layout-preserving)
    enc_proj = jnp.dot(enc.reshape(tb * ts, H), we_ref[...],
                       preferred_element_type=jnp.float32).reshape(tb, ts, H)

    # tanh(concat @ W^T + b) == tanh(enc @ We + (hidden @ Wh + b))
    t = jnp.tanh(enc_proj + hb_sc[...][:, None, :])                 # (tb, ts, H)

    # energies = t @ v : VPU multiply + lane reduce (no degenerate (H,1) MXU op)
    energies = jnp.sum(t * v_ref[...], axis=-1)                     # (tb, ts)

    # --- online softmax update over the S axis ---
    m_prev = m_sc[...]
    m_new = jnp.maximum(m_prev, jnp.max(energies, axis=-1, keepdims=True))
    alpha = jnp.exp(m_prev - m_new)                                 # (tb, 1)
    p = jnp.exp(energies - m_new)                                   # (tb, ts)
    l_sc[...] = alpha * l_sc[...] + jnp.sum(p, axis=-1, keepdims=True)

    if block_s >= 128:
        # Long tiles: batched MXU matmul is worth the systolic push/drain.
        ctx_tile = jnp.einsum("bqs,bsh->bqh", p[:, None, :].astype(enc.dtype), enc,
                              preferred_element_type=jnp.float32)[:, 0, :]
    else:
        # Short tiles: VPU weighted sum + sublane reduce (MXU would be degenerate q=1).
        ctx_tile = jnp.sum(p[:, :, None] * enc.astype(jnp.float32), axis=1)

    acc_sc[...] = alpha * acc_sc[...] + ctx_tile                    # (tb, H)
    m_sc[...] = m_new

    @pl.when(si == last_si)
    def _finalize():
        # Exact normalisation: denominator is only (tb, 1), so the divide is free.
        out_ref[...] = (acc_sc[...] / l_sc[...]).astype(out_ref.dtype)


def _pick_tile(total, preferred):
    """Largest tile <= preferred that divides `total` and is a multiple of 8
    (falls back to the full extent, which is always a legal block size)."""
    if total <= preferred:
        return total
    t = preferred
    while t >= 8:
        if total % t == 0:
            return t
        t -= 8
    return total


def attention_forward(hidden, encoder_outputs, W, b, v,
                      *, block_b=None, block_s=None, matmul_dtype=None):
    """hidden: (B,1,H)  encoder_outputs: (B,S,H)  W: (H,2H)  b: (H,)  v: (H,)

    matmul_dtype: optionally cast MXU operands (e.g. jnp.bfloat16 on v6e/v7x at
    production sizes); accumulation stays f32 and elementwise math stays f32.
    """
    B, S, H = encoder_outputs.shape
    out_dtype = encoder_outputs.dtype

    tb = block_b if block_b is not None else _pick_tile(B, 8)
    ts = block_s if block_s is not None else _pick_tile(S, 256)
    assert B % tb == 0 and S % ts == 0

    # Parameter prep (wrapper-side; hoistable / constant-folds under jit).
    wt_hid = W[:, :H].T          # (H, H)
    wt_enc = W[:, H:].T          # (H, H)
    b_row = b.reshape(1, H).astype(jnp.float32)
    v_row = v.reshape(1, H).astype(jnp.float32)
    h2d = hidden.reshape(B, H)   # (B, H)
    enc = encoder_outputs

    if matmul_dtype is not None:
        wt_hid = wt_hid.astype(matmul_dtype)
        wt_enc = wt_enc.astype(matmul_dtype)
        h2d = h2d.astype(matmul_dtype)
        enc = enc.astype(matmul_dtype)

    grid = (B // tb, S // ts)

    grid_spec = pltpu.PrefetchScalarGridSpec(
        num_scalar_prefetch=0,
        grid=grid,
        in_specs=[
            pl.BlockSpec((tb, H), lambda bi, si: (bi, 0)),        # hidden (2-D)
            pl.BlockSpec((tb, ts, H), lambda bi, si: (bi, si, 0)),  # encoder tile
            pl.BlockSpec((H, H), lambda bi, si: (0, 0)),          # wt_hid
            pl.BlockSpec((H, H), lambda bi, si: (0, 0)),          # wt_enc
            pl.BlockSpec((1, H), lambda bi, si: (0, 0)),          # bias row
            pl.BlockSpec((1, H), lambda bi, si: (0, 0)),          # v row
        ],
        # Same output block across the S axis -> accumulator resident in VMEM.
        out_specs=pl.BlockSpec((tb, H), lambda bi, si: (bi, 0)),
        scratch_shapes=[
            pltpu.VMEM((tb, H), jnp.float32),   # hidden proj + bias
            pltpu.VMEM((tb, 1), jnp.float32),   # running max
            pltpu.VMEM((tb, 1), jnp.float32),   # running denom
            pltpu.VMEM((tb, H), jnp.float32),   # running context
        ],
    )

    ctx2d = pl.pallas_call(
        functools.partial(attention_kernel, block_s=ts),
        out_shape=jax.ShapeDtypeStruct((B, H), out_dtype),
        grid_spec=grid_spec,
        compiler_params=pltpu.CompilerParams(
            # batch tiles independent (sharded across v7x's 2 TCs), S axis is a reduction
            dimension_semantics=("parallel", "arbitrary")),
    )(h2d, enc, wt_hid, wt_enc, b_row, v_row)

    return ctx2d[:, None, :]     # (B, 1, H) to match the PyTorch module


def attention_reference(hidden, encoder_outputs, W, b, v):
    B, S, H = encoder_outputs.shape
    hidden_rep = jnp.broadcast_to(hidden, (B, S, H))
    concat = jnp.concatenate([hidden_rep, encoder_outputs], axis=2)   # (B, S, 2H)
    t = jnp.tanh(concat @ W.T + b)                                    # (B, S, H)
    energies = t @ v                                                  # (B, S)
    weights = jax.nn.softmax(energies, axis=1)                        # (B, S)
    context = jnp.einsum("bs,bsh->bh", weights, encoder_outputs)[:, None, :]
    return context


if __name__ == "__main__":
    B, S, H = 2, 8, 64   # hidden_size = 64 as in the module spec

    key = jax.random.PRNGKey(0)
    k1, k2, k3, k4, k5 = jax.random.split(key, 5)

    # Deterministic parameter init (same shapes as the PyTorch module).
    bound = 1.0 / jnp.sqrt(2.0 * H)
    W = jax.random.uniform(k1, (H, 2 * H), jnp.float32, -bound, bound)  # Linear weight
    b = jax.random.uniform(k2, (H,), jnp.float32, -bound, bound)        # Linear bias
    v = jax.random.uniform(k3, (H,), jnp.float32, 0.0, 1.0)             # torch.rand

    hidden = jax.random.normal(k4, (B, 1, H), jnp.float32)
    encoder_outputs = jax.random.normal(k5, (B, S, H), jnp.float32)

    out = attention_forward(hidden, encoder_outputs, W, b, v)
    out = jax.block_until_ready(out)

    ref = attention_reference(hidden, encoder_outputs, W, b, v)
    assert out.shape == (B, 1, H)
    assert jnp.allclose(out, ref, atol=1e-3, rtol=1e-3)

    print("KERNEL_OK")
</pallas_src>

<mosaic_0001>
module attributes {stable_mosaic.version = 11 : i64} {
  func.func @attention_kernel(%arg0: i32, %arg1: i32, %arg2: memref<2x64xf32, #tpu.memory_space<vmem>>, %arg3: memref<2x8x64xf32, #tpu.memory_space<vmem>>, %arg4: memref<64x64xf32, #tpu.memory_space<vmem>>, %arg5: memref<64x64xf32, #tpu.memory_space<vmem>>, %arg6: memref<1x64xf32, #tpu.memory_space<vmem>>, %arg7: memref<1x64xf32, #tpu.memory_space<vmem>>, %arg8: memref<2x64xf32, #tpu.memory_space<vmem>>, %arg9: memref<2x64xf32, #tpu.memory_space<vmem>>, %arg10: memref<2x1xf32, #tpu.memory_space<vmem>>, %arg11: memref<2x1xf32, #tpu.memory_space<vmem>>, %arg12: memref<2x64xf32, #tpu.memory_space<vmem>>) attributes {dimension_semantics = [#tpu.dimension_semantics<parallel>, #tpu.dimension_semantics<arbitrary>], iteration_bounds = array<i64: 1, 1>, scalar_prefetch = 0 : i64, scratch_operands = 4 : i64, tpu.core_type = #tpu.core_type<tc>, window_params = [{transform_indices = @transform_0, window_bounds = array<i64: 2, 64>}, {transform_indices = @transform_1, window_bounds = array<i64: 2, 8, 64>}, {pipeline_mode = #tpu.pipeline_mode<synchronous>, transform_indices = @transform_2, window_bounds = array<i64: 64, 64>}, {pipeline_mode = #tpu.pipeline_mode<synchronous>, transform_indices = @transform_3, window_bounds = array<i64: 64, 64>}, {pipeline_mode = #tpu.pipeline_mode<synchronous>, transform_indices = @transform_4, window_bounds = array<i64: 1, 64>}, {pipeline_mode = #tpu.pipeline_mode<synchronous>, transform_indices = @transform_5, window_bounds = array<i64: 1, 64>}, {transform_indices = @transform_6, window_bounds = array<i64: 2, 64>}]} {
    %c0_i32 = arith.constant 0 : i32
    %0 = arith.cmpi eq, %arg1, %c0_i32 : i32
    %1 = arith.extui %0 : i1 to i32
    %c0_i32_0 = arith.constant 0 : i32
    %2 = arith.cmpi ne, %1, %c0_i32_0 : i32
    scf.if %2 {
      %c0_27 = arith.constant 0 : index
      %c0_28 = arith.constant 0 : index
      %46 = vector.load %arg2[%c0_27, %c0_28] : memref<2x64xf32, #tpu.memory_space<vmem>>, vector<2x64xf32>
      %c0_29 = arith.constant 0 : index
      %c0_30 = arith.constant 0 : index
      %47 = vector.load %arg4[%c0_29, %c0_30] : memref<64x64xf32, #tpu.memory_space<vmem>>, vector<64x64xf32>
      %cst_31 = arith.constant dense<0.000000e+00> : vector<2x64xf32>
      %48 = tpu.matmul %46, %47, %cst_31 {dimension_numbers = #tpu.dot_dimension_numbers<[1], [0], [0], [1], [0, 0, 1, 1], [], []>} : vector<2x64xf32>, vector<64x64xf32>, vector<2x64xf32> -> vector<2x64xf32>
      %c0_32 = arith.constant 0 : index
      %c0_33 = arith.constant 0 : index
      %49 = vector.load %arg6[%c0_32, %c0_33] : memref<1x64xf32, #tpu.memory_space<vmem>>, vector<1x64xf32>
      %50 = vector.broadcast %49 : vector<1x64xf32> to vector<2x64xf32>
      %51 = arith.addf %48, %50 : vector<2x64xf32>
      %c0_34 = arith.constant 0 : index
      %c0_35 = arith.constant 0 : index
      %52 = vector.load %arg9[%c0_34, %c0_35] : memref<2x64xf32, #tpu.memory_space<vmem>>, vector<2x64xf32>
      tpu.vector_store %arg9[%c0_34, %c0_35], %51 {strides = array<i32>} : memref<2x64xf32, #tpu.memory_space<vmem>>, vector<2x64xf32>,
      %cst_36 = arith.constant 0xFF800000 : f32
      %53 = vector.broadcast %cst_36 : f32 to vector<2x1xf32>
      %c0_37 = arith.constant 0 : index
      %c0_38 = arith.constant 0 : index
      %54 = vector.load %arg10[%c0_37, %c0_38] : memref<2x1xf32, #tpu.memory_space<vmem>>, vector<2x1xf32>
      tpu.vector_store %arg10[%c0_37, %c0_38], %53 {strides = array<i32>} : memref<2x1xf32, #tpu.memory_space<vmem>>, vector<2x1xf32>,
      %cst_39 = arith.constant 0.000000e+00 : f32
      %55 = vector.broadcast %cst_39 : f32 to vector<2x1xf32>
      %c0_40 = arith.constant 0 : index
      %c0_41 = arith.constant 0 : index
      %56 = vector.load %arg11[%c0_40, %c0_41] : memref<2x1xf32, #tpu.memory_space<vmem>>, vector<2x1xf32>
      tpu.vector_store %arg11[%c0_40, %c0_41], %55 {strides = array<i32>} : memref<2x1xf32, #tpu.memory_space<vmem>>, vector<2x1xf32>,
      %cst_42 = arith.constant 0.000000e+00 : f32
      %57 = vector.broadcast %cst_42 : f32 to vector<2x64xf32>
      %c0_43 = arith.constant 0 : index
      %c0_44 = arith.constant 0 : index
      %58 = vector.load %arg12[%c0_43, %c0_44] : memref<2x64xf32, #tpu.memory_space<vmem>>, vector<2x64xf32>
      tpu.vector_store %arg12[%c0_43, %c0_44], %57 {strides = array<i32>} : memref<2x64xf32, #tpu.memory_space<vmem>>, vector<2x64xf32>,
    } else {
    }
    %c0 = arith.constant 0 : index
    %c0_1 = arith.constant 0 : index
    %c0_2 = arith.constant 0 : index
    %3 = vector.load %arg3[%c0, %c0_1, %c0_2] : memref<2x8x64xf32, #tpu.memory_space<vmem>>, vector<2x8x64xf32>
    %4 = vector.shape_cast %3 : vector<2x8x64xf32> to vector<16x64xf32>
    %c0_3 = arith.constant 0 : index
    %c0_4 = arith.constant 0 : index
    %5 = vector.load %arg5[%c0_3, %c0_4] : memref<64x64xf32, #tpu.memory_space<vmem>>, vector<64x64xf32>
    %cst = arith.constant dense<0.000000e+00> : vector<16x64xf32>
    %6 = tpu.matmul %4, %5, %cst {dimension_numbers = #tpu.dot_dimension_numbers<[1], [0], [0], [1], [0, 0, 1, 1], [], []>} : vector<16x64xf32>, vector<64x64xf32>, vector<16x64xf32> -> vector<16x64xf32>
    %7 = vector.shape_cast %6 : vector<16x64xf32> to vector<2x8x64xf32>
    %c0_5 = arith.constant 0 : index
    %c0_6 = arith.constant 0 : index
    %8 = vector.load %arg9[%c0_5, %c0_6] : memref<2x64xf32, #tpu.memory_space<vmem>>, vector<2x64xf32>
    %9 = vector.shape_cast %8 : vector<2x64xf32> to vector<2x1x64xf32>
    %10 = vector.broadcast %9 : vector<2x1x64xf32> to vector<2x8x64xf32>
    %11 = arith.addf %7, %10 : vector<2x8x64xf32>
    %12 = math.tanh %11 : vector<2x8x64xf32>
    %c0_7 = arith.constant 0 : index
    %c0_8 = arith.constant 0 : index
    %13 = vector.load %arg7[%c0_7, %c0_8] : memref<1x64xf32, #tpu.memory_space<vmem>>, vector<1x64xf32>
    %14 = vector.shape_cast %13 : vector<1x64xf32> to vector<1x1x64xf32>
    %15 = vector.broadcast %14 : vector<1x1x64xf32> to vector<2x8x64xf32>
    %16 = arith.mulf %12, %15 : vector<2x8x64xf32>
    %cst_9 = arith.constant dense<0.000000e+00> : vector<2x8xf32>
    %17 = vector.multi_reduction <add>, %16, %cst_9 [2] : vector<2x8x64xf32> to vector<2x8xf32>
    %c0_10 = arith.constant 0 : index
    %c0_11 = arith.constant 0 : index
    %18 = vector.load %arg10[%c0_10, %c0_11] : memref<2x1xf32, #tpu.memory_space<vmem>>, vector<2x1xf32>
    %cst_12 = arith.constant dense<0xFF800000> : vector<2xf32>
    %19 = vector.multi_reduction <maximumf>, %17, %cst_12 [1] : vector<2x8xf32> to vector<2xf32>
    %20 = vector.shape_cast %19 : vector<2xf32> to vector<2x1xf32>
    %21 = arith.maximumf %18, %20 : vector<2x1xf32>
    %22 = arith.subf %18, %21 : vector<2x1xf32>
    %23 = math.exp %22 : vector<2x1xf32>
    %24 = vector.broadcast %21 : vector<2x1xf32> to vector<2x8xf32>
    %25 = arith.subf %17, %24 : vector<2x8xf32>
    %26 = math.exp %25 : vector<2x8xf32>
    %c0_13 = arith.constant 0 : index
    %c0_14 = arith.constant 0 : index
    %27 = vector.load %arg11[%c0_13, %c0_14] : memref<2x1xf32, #tpu.memory_space<vmem>>, vector<2x1xf32>
    %28 = arith.mulf %23, %27 : vector<2x1xf32>
    %cst_15 = arith.constant dense<0.000000e+00> : vector<2xf32>
    %29 = vector.multi_reduction <add>, %26, %cst_15 [1] : vector<2x8xf32> to vector<2xf32>
    %30 = vector.shape_cast %29 : vector<2xf32> to vector<2x1xf32>
    %31 = arith.addf %28, %30 : vector<2x1xf32>
    %c0_16 = arith.constant 0 : index
    %c0_17 = arith.constant 0 : index
    %32 = vector.load %arg11[%c0_16, %c0_17] : memref<2x1xf32, #tpu.memory_space<vmem>>, vector<2x1xf32>
    tpu.vector_store %arg11[%c0_16, %c0_17], %31 {strides = array<i32>} : memref<2x1xf32, #tpu.memory_space<vmem>>, vector<2x1xf32>,
    %33 = vector.shape_cast %26 : vector<2x8xf32> to vector<2x8x1xf32>
    %34 = vector.broadcast %33 : vector<2x8x1xf32> to vector<2x8x64xf32>
    %35 = arith.mulf %34, %3 : vector<2x8x64xf32>
    %cst_18 = arith.constant dense<0.000000e+00> : vector<2x64xf32>
    %36 = vector.multi_reduction <add>, %35, %cst_18 [1] : vector<2x8x64xf32> to vector<2x64xf32>
    %c0_19 = arith.constant 0 : index
    %c0_20 = arith.constant 0 : index
    %37 = vector.load %arg12[%c0_19, %c0_20] : memref<2x64xf32, #tpu.memory_space<vmem>>, vector<2x64xf32>
    %38 = vector.broadcast %23 : vector<2x1xf32> to vector<2x64xf32>
    %39 = arith.mulf %38, %37 : vector<2x64xf32>
    %40 = arith.addf %39, %36 : vector<2x64xf32>
    %c0_21 = arith.constant 0 : index
    %c0_22 = arith.constant 0 : index
    %41 = vector.load %arg12[%c0_21, %c0_22] : memref<2x64xf32, #tpu.memory_space<vmem>>, vector<2x64xf32>
    tpu.vector_store %arg12[%c0_21, %c0_22], %40 {strides = array<i32>} : memref<2x64xf32, #tpu.memory_space<vmem>>, vector<2x64xf32>,
    %c0_23 = arith.constant 0 : index
    %c0_24 = arith.constant 0 : index
    %42 = vector.load %arg10[%c0_23, %c0_24] : memref<2x1xf32, #tpu.memory_space<vmem>>, vector<2x1xf32>
    tpu.vector_store %arg10[%c0_23, %c0_24], %21 {strides = array<i32>} : memref<2x1xf32, #tpu.memory_space<vmem>>, vector<2x1xf32>,
    %c0_i32_25 = arith.constant 0 : i32
    %43 = arith.cmpi eq, %arg1, %c0_i32_25 : i32
    %44 = arith.extui %43 : i1 to i32
    %c0_i32_26 = arith.constant 0 : i32
    %45 = arith.cmpi ne, %44, %c0_i32_26 : i32
    scf.if %45 {
      %c0_27 = arith.constant 0 : index
      %c0_28 = arith.constant 0 : index
      %46 = vector.load %arg12[%c0_27, %c0_28] : memref<2x64xf32, #tpu.memory_space<vmem>>, vector<2x64xf32>
      %c0_29 = arith.constant 0 : index
      %c0_30 = arith.constant 0 : index
      %47 = vector.load %arg11[%c0_29, %c0_30] : memref<2x1xf32, #tpu.memory_space<vmem>>, vector<2x1xf32>
      %48 = vector.broadcast %47 : vector<2x1xf32> to vector<2x64xf32>
      %49 = arith.divf %46, %48 : vector<2x64xf32>
      %c0_31 = arith.constant 0 : index
      %c0_32 = arith.constant 0 : index
      %50 = vector.load %arg8[%c0_31, %c0_32] : memref<2x64xf32, #tpu.memory_space<vmem>>, vector<2x64xf32>
      tpu.vector_store %arg8[%c0_31, %c0_32], %49 {strides = array<i32>} : memref<2x64xf32, #tpu.memory_space<vmem>>, vector<2x64xf32>,
    } else {
    }
    return
  }
  func.func @transform_0(%arg0: i32, %arg1: i32) -> (i32, i32) {
    %c0_i32 = arith.constant 0 : i32
    %c0_i32_0 = arith.constant 0 : i32
    return %arg0, %c0_i32 : i32, i32
  }
  func.func @transform_1(%arg0: i32, %arg1: i32) -> (i32, i32, i32) {
    %c0_i32 = arith.constant 0 : i32
    %c0_i32_0 = arith.constant 0 : i32
    return %arg0, %arg1, %c0_i32 : i32, i32, i32
  }
  func.func @transform_2(%arg0: i32, %arg1: i32) -> (i32, i32) {
    %c0_i32 = arith.constant 0 : i32
    %c0_i32_0 = arith.constant 0 : i32
    %c0_i32_1 = arith.constant 0 : i32
    return %c0_i32, %c0_i32_0 : i32, i32
  }
  func.func @transform_3(%arg0: i32, %arg1: i32) -> (i32, i32) {
    %c0_i32 = arith.constant 0 : i32
    %c0_i32_0 = arith.constant 0 : i32
    %c0_i32_1 = arith.constant 0 : i32
    return %c0_i32, %c0_i32_0 : i32, i32
  }
  func.func @transform_4(%arg0: i32, %arg1: i32) -> (i32, i32) {
    %c0_i32 = arith.constant 0 : i32
    %c0_i32_0 = arith.constant 0 : i32
    %c0_i32_1 = arith.constant 0 : i32
    return %c0_i32, %c0_i32_0 : i32, i32
  }
  func.func @transform_5(%arg0: i32, %arg1: i32) -> (i32, i32) {
    %c0_i32 = arith.constant 0 : i32
    %c0_i32_0 = arith.constant 0 : i32
    %c0_i32_1 = arith.constant 0 : i32
    return %c0_i32, %c0_i32_0 : i32, i32
  }
  func.func @transform_6(%arg0: i32, %arg1: i32) -> (i32, i32) {
    %c0_i32 = arith.constant 0 : i32
    %c0_i32_0 = arith.constant 0 : i32
    return %arg0, %c0_i32 : i32, i32
  }
}

</mosaic_0001>

<llo_original>
// kernel: tpu_custom_call.1
$region0: #{tpu_custom_call.1}
  #allocation0 [shape = 'u32[]', space=smem, size = 0x4, offset = 0x4, fixed_abs, tag = 'smem constant byte address 0x4 - core index']
  #allocation1 [shape = 'u32[144,128]{1,0:T(1,128)}', space=vmem, size = 0x12000, scoped, tag = 'internal scratch']
  #allocation2 [shape = 'f32[2,64]{1,0:T(2,128)}', space=vmem, size = 0x400, scoped, tag = 'scratch operand']
  #allocation3 [shape = 'f32[2,1]{1,0:T(2,128)}', space=vmem, size = 0x400, scoped, tag = 'scratch operand']
  #allocation4 [shape = 'f32[2,1]{1,0:T(2,128)}', space=vmem, size = 0x400, scoped, tag = 'scratch operand']
  #allocation5 [shape = 'f32[2,64]{1,0:T(2,128)}', space=vmem, size = 0x400, scoped, tag = 'scratch operand']
  %s0 = inlined_call_operand.hbm [shape: f32[2,64], index: 0, kind: input, shape index: {}]
  %s1 = inlined_call_operand.hbm [shape: f32[2,8,64], index: 1, kind: input, shape index: {}]
  %s2 = inlined_call_operand.hbm [shape: f32[64,64], index: 2, kind: input, shape index: {}]
  %s3 = inlined_call_operand.hbm [shape: f32[64,64], index: 3, kind: input, shape index: {}]
  %s4 = inlined_call_operand.vmem [shape: f32[1,64], index: 4, kind: input, shape index: {}]
  %s5 = inlined_call_operand.vmem [shape: f32[1,64], index: 5, kind: input, shape index: {}]
  %s6 = inlined_call_operand.hbm [shape: f32[2,64], index: 6, kind: output, shape index: {}]
  %s7 = sld [smem:[#allocation0]]
  $region58: #{tpu_custom_call.1} parent=0
    _
  %s9 = ssub.s32 1, %s7
  %s10 = scalar_select 0, %s9, %s7
  $region1: #{tpu_custom_call.1} parent=0
    #allocation6 [shape = 'u8[1024]{0}', space=vmem, size = 0x400, scoped, tag = 'input window, operand 0, single buffered']
    #allocation7 [shape = 's32[1]{0}', space=sflag, size = 0x4, scoped, tag = 'scoped memory for tpu_custom_call.1']
    #allocation8 [shape = 's32[1]{0}', space=sflag, size = 0x4, scoped, tag = 'scoped memory for tpu_custom_call.1']
    #allocation9 [shape = 'u8[8192]{0}', space=vmem, size = 0x2000, scoped, tag = 'input window, operand 1, single buffered']
    #allocation10 [shape = 's32[1]{0}', space=sflag, size = 0x4, scoped, tag = 'scoped memory for tpu_custom_call.1']
    #allocation11 [shape = 'u8[32768]{0}', space=vmem, size = 0x8000, scoped, tag = 'input window, operand 2, single buffered']
    #allocation12 [shape = 'u8[32768]{0}', space=vmem, size = 0x8000, scoped, tag = 'input window, operand 3, single buffered']
    #allocation13 [shape = 's32[1]{0}', space=sflag, size = 0x4, scoped, tag = 'scoped memory for tpu_custom_call.1']
    #allocation14 [shape = 'u8[1024]{0}', space=vmem, size = 0x400, scoped, tag = 'output window, operand 0, single buffered']
    %11 = vsyncpa [#allocation7], 0
    %12 = vsyncpa [#allocation10], 0
    %13 = vsyncpa [#allocation13], 0
    %14 = vsyncpa [#allocation8], 0
    // Predicated region
    $region2: #{tpu_custom_call.1} parent=1 // pred_check
      _
    $region3: #{tpu_custom_call.1} parent=1 // pred_check_branch
      %16 = sbr.rel (0) target = $region5
    $region4: #{tpu_custom_call.1} parent=1 // pred_region
      %s18 = ssub.s32 32, 32
      %19 = vsyncadd [#allocation7], %s18
      %s21 = sshll.u32 [#allocation6], 4
      %s22 = int_to_ptr.vmem [resolvable:$true] %s21
      %24 = dma.hbm_to_vmem [thread:$0]  %s0, 32, %s22, [#allocation7]
    $region5: #{tpu_custom_call.1} parent=1 // pred_fallthru
      _
    // Predicated region
    $region6: #{tpu_custom_call.1} parent=1 // pred_check
      _
    $region7: #{tpu_custom_call.1} parent=1 // pred_check_branch
      %26 = sbr.rel (0) target = $region9
    $region8: #{tpu_custom_call.1} parent=1 // pred_region
      %s28 = ssub.s32 256, 256
      %29 = vsyncadd [#allocation10], %s28
      %s30 = sshll.u32 [#allocation9], 4
      %s31 = int_to_ptr.vmem [resolvable:$true] %s30
      %36 = dma.hbm_to_vmem [thread:$0]  %s1, 256, %s31, [#allocation10], 128, 128, 8
    $region9: #{tpu_custom_call.1} parent=1 // pred_fallthru
      _
    // Predicated region
    $region10: #{tpu_custom_call.1} parent=1 // pred_check
      _
    $region11: #{tpu_custom_call.1} parent=1 // pred_check_branch
      %38 = sbr.rel (0) target = $region13
    $region12: #{tpu_custom_call.1} parent=1 // pred_region
      %s40 = ssub.s32 1024, 1024
      %41 = vsyncadd [#allocation10], %s40
      %s42 = sshll.u32 [#allocation11], 4
      %s43 = int_to_ptr.vmem [resolvable:$true] %s42
      %48 = dma.hbm_to_vmem [thread:$0]  %s2, 1024, %s43, [#allocation10], 128, 128, 8
    $region13: #{tpu_custom_call.1} parent=1 // pred_fallthru
      _
    // Predicated region
    $region14: #{tpu_custom_call.1} parent=1 // pred_check
      _
    $region15: #{tpu_custom_call.1} parent=1 // pred_check_branch
      %50 = sbr.rel (0) target = $region17
    $region16: #{tpu_custom_call.1} parent=1 // pred_region
      %s52 = ssub.s32 1024, 1024
      %53 = vsyncadd [#allocation13], %s52
      %s54 = sshll.u32 [#allocation12], 4
      %s55 = int_to_ptr.vmem [resolvable:$true] %s54
      %60 = dma.hbm_to_vmem [thread:$0]  %s3, 1024, %s55, [#allocation13], 128, 128, 8
    $region17: #{tpu_custom_call.1} parent=1 // pred_fallthru
      _
    // Predicated region
    $region18: #{tpu_custom_call.1} parent=1 // pred_check
      _
    $region19: #{tpu_custom_call.1} parent=1 // pred_check_branch
      %62 = sbr.rel (0) target = $region21
    $region20: #{tpu_custom_call.1} parent=1 // pred_region
      _
    $region21: #{tpu_custom_call.1} parent=1 // pred_fallthru
      _
    // Predicated region
    $region22: #{tpu_custom_call.1} parent=1 // pred_check
      _
    $region23: #{tpu_custom_call.1} parent=1 // pred_check_branch
      %64 = sbr.rel (0) target = $region25
    $region24: #{tpu_custom_call.1} parent=1 // pred_region
      _
    $region25: #{tpu_custom_call.1} parent=1 // pred_fallthru
      _
    // Predicated region
    $region26: #{tpu_custom_call.1} parent=1 // pred_check
      _
    $region27: #{tpu_custom_call.1} parent=1 // pred_check_branch
      %66 = sbr.rel (0) target = $region29
    $region28: #{tpu_custom_call.1} parent=1 // pred_region
      %67 = dma.done [#allocation7], 32
    $region29: #{tpu_custom_call.1} parent=1 // pred_fallthru
      _
    // Predicated region
    $region30: #{tpu_custom_call.1} parent=1 // pred_check
      _
    $region31: #{tpu_custom_call.1} parent=1 // pred_check_branch
      %69 = sbr.rel (0) target = $region33
    $region32: #{tpu_custom_call.1} parent=1 // pred_region
      %70 = dma.done [#allocation10], 256
    $region33: #{tpu_custom_call.1} parent=1 // pred_fallthru
      _
    // Predicated region
    $region34: #{tpu_custom_call.1} parent=1 // pred_check
      _
    $region35: #{tpu_custom_call.1} parent=1 // pred_check_branch
      %72 = sbr.rel (0) target = $region37
    $region36: #{tpu_custom_call.1} parent=1 // pred_region
      %73 = dma.done [#allocation10], 1024
    $region37: #{tpu_custom_call.1} parent=1 // pred_fallthru
      _
    // Predicated region
    $region38: #{tpu_custom_call.1} parent=1 // pred_check
      _
    $region39: #{tpu_custom_call.1} parent=1 // pred_check_branch
      %75 = sbr.rel (0) target = $region41
    $region40: #{tpu_custom_call.1} parent=1 // pred_region
      %76 = dma.done [#allocation13], 1024
    $region41: #{tpu_custom_call.1} parent=1 // pred_fallthru
      _
    %p77 = scmp.eq.s32.totalorder 0, 0
    // Predicated region
    $region42: #{tpu_custom_call.1} parent=1 // pred_check
      %p78 = pneg %p77
    $region43: #{tpu_custom_call.1} parent=1 // pred_check_branch
      %80 = sbr.rel (%p78) target = $region45
    $region44: #{tpu_custom_call.1} parent=1 // pred_region
      %v81 = vld [vmem:[#allocation6] sm:$0x3]
      %v82 = vld [vmem:[#allocation11] sm:$0xff]
      %v83 = vld [vmem:[#allocation11 + $0x8] sm:$0xff]
      %v84 = vld [vmem:[#allocation11 + $0x10] sm:$0xff]
      %v85 = vld [vmem:[#allocation11 + $0x18] sm:$0xff]
      %v86 = vld [vmem:[#allocation11 + $0x20] sm:$0xff]
      %v87 = vld [vmem:[#allocation11 + $0x28] sm:$0xff]
      %v88 = vld [vmem:[#allocation11 + $0x30] sm:$0xff]
      %v89 = vld [vmem:[#allocation11 + $0x38] sm:$0xff]
      %v90 = vld [vmem:[%s4] sm:$0x1]
      %v92 = vlaneseq
      %v93 = vshrl.u32 %v92, 7
      %v94 = vsub.s32 0, %v93
      %v95 = vrot.slane %v90, %v94
      %vm97 = vcmask 523264
      %v99 = vsel %vm97, %v81, 0
      %101 = vmatprep.subr.mxu0 0.0
      %102 = vmatpush1.msra.mxu0 %v82
      %103 = vmatprep.subr.mxu0 0.0
      %104 = vmatpush1.msra.mxu0 %v83
      %105 = vmatprep.subr.mxu0 0.0
      %106 = vmatpush1.msra.mxu0 %v84
      %107 = vmatprep.subr.mxu0 0.0
      %108 = vmatpush1.msra.mxu0 %v85
      %109 = vmatprep.subr.mxu0 0.0
      %110 = vmatpush1.msra.mxu0 %v86
      %111 = vmatprep.subr.mxu0 0.0
      %112 = vmatpush1.msra.mxu0 %v87
      %113 = vmatprep.subr.mxu0 0.0
      %114 = vmatpush1.msra.mxu0 %v88
      %115 = vmatprep.subr.mxu0 0.0
      %116 = vmatpush1.msra.mxu0 %v89
      %117 = vmatprep.subr.mxu0 0.0
      %118 = vmatpush1.msra.mxu0 0.0
      %119 = vmatprep.subr.mxu0 0.0
      %120 = vmatpush1.msra.mxu0 0.0
      %121 = vmatprep.subr.mxu0 0.0
      %122 = vmatpush1.msra.mxu0 0.0
      %123 = vmatprep.subr.mxu0 0.0
      %124 = vmatpush1.msra.mxu0 0.0
      %125 = vmatprep.subr.mxu0 0.0
      %126 = vmatpush1.msra.mxu0 0.0
      %127 = vmatprep.subr.mxu0 0.0
      %128 = vmatpush1.msra.mxu0 0.0
      %129 = vmatprep.subr.mxu0 0.0
      %130 = vmatpush1.msra.mxu0 0.0
      %131 = vmatprep.subr.mxu0 0.0
      %132 = vmatpush1.msra.mxu0 0.0
      %133 = vmatprep.subr.mxu0 0.0
      %134 = vmatpush1.msra.mxu0 0.0
      %135 = vmatprep.subr.mxu0 0.0
      %136 = vmatpush1.msra.mxu0 0.0
      %137 = vmatprep.subr.mxu0 0.0
      %138 = vmatpush1.msra.mxu0 0.0
      %139 = vmatprep.subr.mxu0 0.0
      %140 = vmatpush1.msra.mxu0 0.0
      %141 = vmatprep.subr.mxu0 0.0
      %142 = vmatpush1.msra.mxu0 0.0
      %143 = vmatprep.subr.mxu0 0.0
      %144 = vmatpush1.msra.mxu0 0.0
      %145 = vmatprep.subr.mxu0 0.0
      %146 = vmatpush1.msra.mxu0 0.0
      %147 = vmatprep.subr.mxu0 0.0
      %148 = vmatpush1.msra.mxu0 0.0
      %149 = vmatprep.subr.mxu0 0.0
      %150 = vmatpush1.msra.mxu0 0.0
      %151 = vmatprep.subr.mxu0 0.0
      %152 = vmatpush1.msra.mxu0 0.0
      %153 = vmatprep.subr.mxu0 0.0
      %154 = vmatpush1.msra.mxu0 0.0
      %155 = vmatprep.subr.mxu0 0.0
      %156 = vmatpush1.msra.mxu0 0.0
      %157 = vmatprep.subr.mxu0 0.0
      %158 = vmatpush1.msra.mxu0 0.0
      %159 = vmatprep.subr.mxu0 0.0
      %160 = vmatpush1.msra.mxu0 0.0
      %161 = vmatprep.subr.mxu0 0.0
      %162 = vmatpush1.msra.mxu0 0.0
      %163 = vmatprep.subr.mxu0 0.0
      %164 = vmatpush1.msra.mxu0 0.0
      %165 = vmatprep.mubr.f32.mxu0 0.0
      %166 = vmatmul.mubr.f32.gmra.mrb[0].mxu0 %v99
      %v167 = vpop.f32.mrb[0].mxu0
      %v168 = vadd.f32 %v95, %v167
      %v169 = vpop.f32.mrb[0].mxu0
      %170 = vdwg.mxu0
      %vm171 = vcmask 517120
      %172 = vst.msk [vmem:[#allocation2] sm:$0x3] %vm171, %v168
      %vm173 = vcmask 1024
      %174 = vst.msk [vmem:[#allocation3] sm:$0x3] %vm173, -inf
      %175 = vst.msk [vmem:[#allocation4] sm:$0x3] %vm173, 0.0
      %176 = vst.msk [vmem:[#allocation5] sm:$0x3] %vm171, 0.0
    $region45: #{tpu_custom_call.1} parent=1 // pred_fallthru
      _
    %v177 = vld [vmem:[#allocation9] sm:$0xff]
    %v178 = vld [vmem:[#allocation9 + $0x8] sm:$0xff]
    %v179 = vld [vmem:[#allocation12] sm:$0xff]
    %v180 = vld [vmem:[#allocation12 + $0x8] sm:$0xff]
    %v181 = vld [vmem:[#allocation12 + $0x10] sm:$0xff]
    %v182 = vld [vmem:[#allocation12 + $0x18] sm:$0xff]
    %v183 = vld [vmem:[#allocation12 + $0x20] sm:$0xff]
    %v184 = vld [vmem:[#allocation12 + $0x28] sm:$0xff]
    %v185 = vld [vmem:[#allocation12 + $0x30] sm:$0xff]
    %v186 = vld [vmem:[#allocation12 + $0x38] sm:$0xff]
    %vm187 = vcmask 523264
    %v189 = vsel %vm187, %v177, 0
    %v192 = vsel %vm187, %v178, 0
    %194 = vmatprep.subr.mxu0 0.0
    %195 = vmatpush1.msra.mxu0 %v179
    %196 = vmatprep.subr.mxu0 0.0
    %197 = vmatpush1.msra.mxu0 %v180
    %198 = vmatprep.subr.mxu0 0.0
    %199 = vmatpush1.msra.mxu0 %v181
    %200 = vmatprep.subr.mxu0 0.0
    %201 = vmatpush1.msra.mxu0 %v182
    %202 = vmatprep.subr.mxu0 0.0
    %203 = vmatpush1.msra.mxu0 %v183
    %204 = vmatprep.subr.mxu0 0.0
    %205 = vmatpush1.msra.mxu0 %v184
    %206 = vmatprep.subr.mxu0 0.0
    %207 = vmatpush1.msra.mxu0 %v185
    %208 = vmatprep.subr.mxu0 0.0
    %209 = vmatpush1.msra.mxu0 %v186
    %210 = vmatprep.subr.mxu0 0.0
    %211 = vmatpush1.msra.mxu0 0.0
    %212 = vmatprep.subr.mxu0 0.0
    %213 = vmatpush1.msra.mxu0 0.0
    %214 = vmatprep.subr.mxu0 0.0
    %215 = vmatpush1.msra.mxu0 0.0
    %216 = vmatprep.subr.mxu0 0.0
    %217 = vmatpush1.msra.mxu0 0.0
    %218 = vmatprep.subr.mxu0 0.0
    %219 = vmatpush1.msra.mxu0 0.0
    %220 = vmatprep.subr.mxu0 0.0
    %221 = vmatpush1.msra.mxu0 0.0
    %222 = vmatprep.subr.mxu0 0.0
    %223 = vmatpush1.msra.mxu0 0.0
    %224 = vmatprep.subr.mxu0 0.0
    %225 = vmatpush1.msra.mxu0 0.0
    %226 = vmatprep.subr.mxu0 0.0
    %227 = vmatpush1.msra.mxu0 0.0
    %228 = vmatprep.subr.mxu0 0.0
    %229 = vmatpush1.msra.mxu0 0.0
    %230 = vmatprep.subr.mxu0 0.0
    %231 = vmatpush1.msra.mxu0 0.0
    %232 = vmatprep.subr.mxu0 0.0
    %233 = vmatpush1.msra.mxu0 0.0
    %234 = vmatprep.subr.mxu0 0.0
    %235 = vmatpush1.msra.mxu0 0.0
    %236 = vmatprep.subr.mxu0 0.0
    %237 = vmatpush1.msra.mxu0 0.0
    %238 = vmatprep.subr.mxu0 0.0
    %239 = vmatpush1.msra.mxu0 0.0
    %240 = vmatprep.subr.mxu0 0.0
    %241 = vmatpush1.msra.mxu0 0.0
    %242 = vmatprep.subr.mxu0 0.0
    %243 = vmatpush1.msra.mxu0 0.0
    %244 = vmatprep.subr.mxu0 0.0
    %245 = vmatpush1.msra.mxu0 0.0
    %246 = vmatprep.subr.mxu0 0.0
    %247 = vmatpush1.msra.mxu0 0.0
    %248 = vmatprep.subr.mxu0 0.0
    %249 = vmatpush1.msra.mxu0 0.0
    %250 = vmatprep.subr.mxu0 0.0
    %251 = vmatpush1.msra.mxu0 0.0
    %252 = vmatprep.subr.mxu0 0.0
    %253 = vmatpush1.msra.mxu0 0.0
    %254 = vmatprep.subr.mxu0 0.0
    %255 = vmatpush1.msra.mxu0 0.0
    %256 = vmatprep.subr.mxu0 0.0
    %257 = vmatpush1.msra.mxu0 0.0
    %258 = vmatprep.mubr.f32.mxu0 0.0
    %259 = vmatmul.mubr.f32.gmra.mrb[0].mxu0 %v189
    %v260 = vpop.f32.mrb[0].mxu0
    %v261 = vadd.f32 0.0, %v260
    %v262 = vpop.f32.mrb[0].mxu0
    %263 = vmatprep.mubr.f32.mxu0 0.0
    %264 = vmatmul.mubr.f32.gmra.mrb[0].mxu0 %v192
    %v265 = vpop.f32.mrb[0].mxu0
    %v266 = vadd.f32 0.0, %v265
    %v267 = vpop.f32.mrb[0].mxu0
    %268 = vdwg.mxu0
    %v269 = vld [vmem:[#allocation2] sm:$0x3]
    %v272 = vunpack.c.l.s4 1966171168
    %v273 = vunpack.c.0.s8 %v272
    %v274 = vlaneseq
    %v275 = vshrl.u32 %v274, 7
    %v276 = vsub.s32 %v273, %v275
    %v277 = vrot.slane %v269, %v276
    %v278 = vcombine.high %v277, %v277
    %v280 = vunpack.c.l.s4 1966171168
    %v281 = vunpack.c.0.s8 %v280
    %v282 = vlaneseq
    %v283 = vshrl.u32 %v282, 7
    %v284 = vsub.s32 %v281, %v283
    %v285 = vrot.slane %v277, %v284
    %v287 = vunpack.c.l.s4 1966171168
    %v288 = vunpack.c.0.s8 %v287
    %v289 = vlaneseq
    %v290 = vshrl.u32 %v289, 7
    %v291 = vsub.s32 %v288, %v290
    %v292 = vrot.slane %v278, %v291
    %v293 = vlaneseq
    %v294 = vshrl.u32 %v293, 7
    %v295 = vsub.s32 0, %v294
    %v296 = vrot.slane %v285, %v295
    %v297 = vlaneseq
    %v298 = vshrl.u32 %v297, 7
    %v299 = vsub.s32 0, %v298
    %v300 = vrot.slane %v292, %v299
    %v303 = vadd.f32 %v261, %v296
    %v304 = vadd.f32 %v266, %v300
    %v305 = vtanh.pop %v303
    %v306 = vtanh.pop %v304
    %v307 = vld [vmem:[%s5] sm:$0x1]
    %v309 = vlaneseq
    %v310 = vshrl.u32 %v309, 7
    %v311 = vsub.s32 0, %v310
    %v312 = vrot.slane %v307, %v311
    %v314 = vmul.f32 %v305, %v312
    %v315 = vmul.f32 %v306, %v312
    %v316 = vsel %vm187, %v314, 0.0
    %317 = vadd.xlane.f32.xlu0 %v316
    %v318 = vpop.xlane.xlu0 %317
    %v319 = vsel %vm187, %v315, 0.0
    %320 = vadd.xlane.f32.xlu0 %v319
    %v321 = vpop.xlane.xlu0 %320
    %v322 = vld [vmem:[#allocation3] sm:$0x3]
    %v325 = vlaneseq
    %v326 = vand.u32 %v325, 127
    %v327 = vlaneseq
    %v328 = vshrl.u32 %v327, 7
    %v329 = vsub.s32 %v326, %v328
    %v330 = vrot.slane %v318, %v329
    %v331 = vlaneseq
    %v332 = vshrl.u32 %v331, 7
    %v333 = vsub.s32 %v326, %v332
    %v334 = vrot.slane %v321, %v333
    %vm335 = vcmask 1041409
    %v336 = vsel %vm335, %v334, %v330
    %vm338 = vcmask 58368
    %v339 = vsel %vm338, %v336, -inf
    %340 = vmax.xlane.f32.xlu0 %v339
    %v341 = vpop.xlane.xlu0 %340
    %v342 = vmax.f32 %v322, %v341
    %v343 = vsub.f32 %v322, %v342
    %v344 = vmul.f32 %v343, 1.442695
    %v345 = vpow.pop %v344
    %347 = vset.pattern.permute.xlu0 0
    %348 = vperm.xlu0 %347, %v342
    %v349 = vpop.permute.xlu0 %348
    %v350 = vlaneseq
    %v351 = vshrl.u32 %v350, 7
    %v352 = vsub.s32 0, %v351
    %v353 = vrot.slane %v349, %v352
    %v354 = vlaneseq
    %v355 = vshrl.u32 %v354, 7
    %v356 = vsub.s32 1, %v355
    %v357 = vrot.slane %v349, %v356
    %v360 = vsub.f32 %v318, %v353
    %v361 = vsub.f32 %v321, %v357
    %v362 = vmul.f32 %v360, 1.442695
    %v363 = vpow.pop %v362
    %v364 = vmul.f32 %v361, 1.442695
    %v365 = vpow.pop %v364
    %v366 = vld [vmem:[#allocation4] sm:$0x3]
    %v367 = vmul.f32 %v345, %v366
    %370 = vset.pattern.permute.xlu0 0
    %371 = vperm.xlu0 %370, %v363
    %v372 = vpop.permute.xlu0 %371
    %373 = vset.pattern.permute.xlu0 0
    %374 = vperm.xlu0 %373, %v365
    %v375 = vpop.permute.xlu0 %374
    %v376 = vlaneseq
    %v377 = vshrl.u32 %v376, 7
    %v378 = vsub.s32 %v326, %v377
    %v379 = vrot.slane %v372, %v378
    %v380 = vlaneseq
    %v381 = vshrl.u32 %v380, 7
    %v382 = vsub.s32 %v326, %v381
    %v383 = vrot.slane %v375, %v382
    %v384 = vsel %vm335, %v383, %v379
    %v386 = vsel %vm338, %v384, 0.0
    %387 = vadd.xlane.f32.xlu0 %v386
    %v388 = vpop.xlane.xlu0 %387
    %v389 = vadd.f32 %v367, %v388
    %vm390 = vcmask 1024
    %391 = vst.msk [vmem:[#allocation4] sm:$0x3] %vm390, %v389
    %v394 = vmul.f32 %v372, %v177
    %v395 = vmul.f32 %v375, %v178
    %v396 = vsel %vm187, %v394, 0.0
    %v397 = vrot.slane %v396, 4
    %v398 = vadd.f32 %v396, %v397
    %v399 = vrot.slane %v398, 2
    %v400 = vadd.f32 %v398, %v399
    %v401 = vrot.slane %v400, 1
    %v402 = vadd.f32 %v400, %v401
    %v403 = vsel %vm187, %v395, 0.0
    %v404 = vrot.slane %v403, 4
    %v405 = vadd.f32 %v403, %v404
    %v406 = vrot.slane %v405, 2
    %v407 = vadd.f32 %v405, %v406
    %v408 = vrot.slane %v407, 1
    %v409 = vadd.f32 %v407, %v408
    %v410 = vld [vmem:[#allocation5] sm:$0x3]
    %412 = vset.pattern.permute.xlu0 0
    %413 = vperm.xlu0 %412, %v345
    %v414 = vpop.permute.xlu0 %413
    %v416 = vmul.f32 %v414, %v410
    %v419 = vsel %vm335, %v409, %v402
    %v421 = vadd.f32 %v416, %v419
    %vm422 = vcmask 517120
    %423 = vst.msk [vmem:[#allocation5] sm:$0x3] %vm422, %v421
    %424 = vst.msk [vmem:[#allocation3] sm:$0x3] %vm390, %v342
    // Predicated region
    $region46: #{tpu_custom_call.1} parent=1 // pred_check
      %p425 = pneg %p77
    $region47: #{tpu_custom_call.1} parent=1 // pred_check_branch
      %427 = sbr.rel (%p425) target = $region49
    $region48: #{tpu_custom_call.1} parent=1 // pred_region
      %v428 = vld [vmem:[#allocation5] sm:$0x3]
      %v429 = vld [vmem:[#allocation4] sm:$0x3]
      %431 = vset.pattern.permute.xlu0 0
      %432 = vperm.xlu0 %431, %v429
      %v433 = vpop.permute.xlu0 %432
      %v435 = vrcp.pop %v433
      %v436 = vmul.f32 %v428, %v435
      %437 = vst.msk [vmem:[#allocation14] sm:$0x3] %vm422, %v436
    $region49: #{tpu_custom_call.1} parent=1 // pred_fallthru
      _
    // Predicated region
    $region50: #{tpu_custom_call.1} parent=1 // pred_check
      _
    $region51: #{tpu_custom_call.1} parent=1 // pred_check_branch
      %439 = sbr.rel (0) target = $region53
    $region52: #{tpu_custom_call.1} parent=1 // pred_region
      %s441 = ssub.s32 32, 32
      %442 = vsyncadd [#allocation8], %s441
      %s444 = sshll.u32 [#allocation14], 4
      %s445 = int_to_ptr.vmem [resolvable:$true] %s444
      %447 = dma.vmem_to_hbm [thread:$0]  %s445, 32, %s6, [#allocation8]
    $region53: #{tpu_custom_call.1} parent=1 // pred_fallthru
      _
    // Predicated region
    $region54: #{tpu_custom_call.1} parent=1 // pred_check
      _
    $region55: #{tpu_custom_call.1} parent=1 // pred_check_branch
      %449 = sbr.rel (0) target = $region57
    $region56: #{tpu_custom_call.1} parent=1 // pred_region
      %450 = dma.done [#allocation8], 32
    $region57: #{tpu_custom_call.1} parent=1 // pred_fallthru
      _
    %451 = vsyncpa [#allocation7], 1
    %452 = vsyncpa [#allocation10], 1
    %453 = vsyncpa [#allocation13], 1
    %454 = vsyncpa [#allocation8], 1

</llo_original>
